<compile_context>
chip_gen: v5e
topology: v5e:2x2
jax: 0.10.0
libtpu: 0.0.40
codegen_flags: <defaults>
</compile_context>

<pallas_src>
import math

import jax
import jax.numpy as jnp
from jax.experimental import pallas as pl
from jax.experimental.pallas import tpu as pltpu


def _round_up(n, m):
    return (n + m - 1) // m * m


def _sublane(dtype):
    """Minimal legal second-to-last block-dim multiple for `dtype`."""
    return max(8, 32 // jnp.dtype(dtype).itemsize)   # f32->8, bf16->16, int8->32


def _mlp_kernel(x_ref,
                w1_ref, b1_ref,
                w2_ref, b2_ref,
                w3_ref, b3_ref,
                w4_ref, b4_ref,
                o_ref):
    """Fused 4-layer MLP on one batch tile. Weights stay resident in VMEM.

    MXU inputs use the weights' dtype (f32 or bf16); accumulation, bias add
    and ReLU are always f32 (v5e VPU has no bf16 ALU).
    """
    cdt = w1_ref.dtype

    x = x_ref[...].astype(cdt)

    # layer1: Linear + ReLU
    h = jnp.dot(x, w1_ref[...], preferred_element_type=jnp.float32) + b1_ref[...]
    h = jnp.maximum(h, 0.0)

    # layer2: Linear + ReLU
    h = jnp.dot(h.astype(cdt), w2_ref[...],
                preferred_element_type=jnp.float32) + b2_ref[...]
    h = jnp.maximum(h, 0.0)

    # layer3: Linear + ReLU
    h = jnp.dot(h.astype(cdt), w3_ref[...],
                preferred_element_type=jnp.float32) + b3_ref[...]
    h = jnp.maximum(h, 0.0)

    # layer4: Linear (no activation)
    out = jnp.dot(h.astype(cdt), w4_ref[...],
                  preferred_element_type=jnp.float32) + b4_ref[...]

    o_ref[...] = out.astype(o_ref.dtype)


def init_params(key, in_dim, n_hidden_1, n_hidden_2, n_hidden_3, out_dim):
    """nn.Linear-style init (uniform +/- 1/sqrt(fan_in)).

    Weights are stored transposed ([in, out]) vs PyTorch's [out, in];
    biases are stored as [1, out]. All f32, logical (unpadded) shapes.
    """
    dims = [(in_dim, n_hidden_1), (n_hidden_1, n_hidden_2),
            (n_hidden_2, n_hidden_3), (n_hidden_3, out_dim)]
    params = {}
    keys = jax.random.split(key, 2 * len(dims))
    for i, (fan_in, fan_out) in enumerate(dims):
        bound = 1.0 / math.sqrt(fan_in)
        params[f"w{i + 1}"] = jax.random.uniform(
            keys[2 * i], (fan_in, fan_out), jnp.float32, -bound, bound)
        params[f"b{i + 1}"] = jax.random.uniform(
            keys[2 * i + 1], (1, fan_out), jnp.float32, -bound, bound)
    return params


def cast_params(params, compute_dtype=jnp.bfloat16):
    """Cast weights to the MXU compute dtype (one-time); biases stay f32."""
    out = {}
    for i in range(1, 5):
        out[f"w{i}"] = params[f"w{i}"].astype(compute_dtype)
        out[f"b{i}"] = params[f"b{i}"].astype(jnp.float32)
    return out


def twentyclassification_forward(x, params, *, block_batch=2048,
                                 min_grid_steps=2, out_dtype=None):
    """Fused MLP forward.

    x:        [B, in_dim]; streamed in its own dtype (pass bf16 to halve the
              dominant input DMA traffic on the bf16 weight path).
    params:   dict w1..w4 ([in,out]) / b1..b4 ([1,out]); weights f32 or bf16
              (see cast_params), biases f32.
    block_batch:    max batch-tile rows per grid step (large tiles amortize
                    grid overhead; VMEM use is tiny for this model).
    min_grid_steps: target minimum number of grid steps (>=2 lets the
                    "parallel" batch axis shard across v7x's 2 TensorCores).
    out_dtype:      output dtype (default: x.dtype). bf16 halves writeback.
    """
    w1, b1 = params["w1"], params["b1"]
    w2, b2 = params["w2"], params["b2"]
    w3, b3 = params["w3"], params["b3"]
    w4, b4 = params["w4"], params["b4"]

    B, in_dim = x.shape
    assert in_dim == w1.shape[0]
    h1, h2, h3 = w1.shape[1], w2.shape[1], w3.shape[1]
    out_dim = w4.shape[1]
    if out_dtype is None:
        out_dtype = x.dtype

    # Batch tile: legal sublane multiple for both streamed dtypes, capped by
    # block_batch, shrunk (when B is large enough) so grid >= min_grid_steps.
    align = max(_sublane(x.dtype), _sublane(out_dtype))
    target = pl.cdiv(B, max(1, min_grid_steps))
    tb = min(_round_up(target, align), _round_up(block_batch, align))
    tb = max(tb, align)
    grid = (pl.cdiv(B, tb),)   # trailing partial blocks are masked by Pallas

    resident = lambda i: (0, 0)   # weights/biases: same block every step
    streamed = lambda i: (i, 0)   # activations: one batch tile per step

    flops = 2 * B * (in_dim * h1 + h1 * h2 + h2 * h3 + h3 * out_dim)
    bytes_accessed = (
        x.size * x.dtype.itemsize
        + sum(p.size * p.dtype.itemsize for p in
              (w1, b1, w2, b2, w3, b3, w4, b4))       # resident: loaded once
        + B * out_dim * jnp.dtype(out_dtype).itemsize)

    return pl.pallas_call(
        _mlp_kernel,
        out_shape=jax.ShapeDtypeStruct((B, out_dim), out_dtype),
        grid=grid,
        in_specs=[
            pl.BlockSpec((tb, in_dim), streamed),
            pl.BlockSpec(w1.shape, resident), pl.BlockSpec(b1.shape, resident),
            pl.BlockSpec(w2.shape, resident), pl.BlockSpec(b2.shape, resident),
            pl.BlockSpec(w3.shape, resident), pl.BlockSpec(b3.shape, resident),
            pl.BlockSpec(w4.shape, resident), pl.BlockSpec(b4.shape, resident),
        ],
        out_specs=pl.BlockSpec((tb, out_dim), streamed),
        compiler_params=pltpu.CompilerParams(
            dimension_semantics=("parallel",)),
        cost_estimate=pl.CostEstimate(
            flops=flops, transcendentals=0, bytes_accessed=bytes_accessed),
    )(x, w1, b1, w2, b2, w3, b3, w4, b4)


def reference_forward(x, params):
    """Plain-JAX f32 reference for correctness checking."""
    h = jnp.maximum(x @ params["w1"] + params["b1"], 0.0)
    h = jnp.maximum(h @ params["w2"] + params["b2"], 0.0)
    h = jnp.maximum(h @ params["w3"] + params["b3"], 0.0)
    return h @ params["w4"] + params["b4"]


if __name__ == "__main__":
    # Small shapes consistent with the module: 32 -> 64 -> 64 -> 64 -> 20.
    in_dim, n_h1, n_h2, n_h3, out_dim = 32, 64, 64, 64, 20

    key = jax.random.PRNGKey(0)
    kx, kx2, kp = jax.random.split(key, 3)
    params = init_params(kp, in_dim, n_h1, n_h2, n_h3, out_dim)

    # --- run 1: tiny batch, all-f32 strict-parity path, single grid step ----
    x_small = jax.random.normal(kx, (8, in_dim), dtype=jnp.float32)
    out = jax.block_until_ready(twentyclassification_forward(x_small, params))
    ref = reference_forward(x_small, params)
    assert out.shape == (8, out_dim) and out.dtype == jnp.float32
    assert jnp.allclose(out, ref, atol=1e-5, rtol=1e-5)

    # --- run 2: larger non-multiple batch, f32, multi-step grid -------------
    x_big = jax.random.normal(kx2, (300, in_dim), dtype=jnp.float32)
    out2 = jax.block_until_ready(
        twentyclassification_forward(x_big, params, block_batch=128))
    ref2 = reference_forward(x_big, params)
    assert out2.shape == (300, out_dim)
    assert jnp.allclose(out2, ref2, atol=1e-5, rtol=1e-5)

    # --- run 3: bf16 fast path (bf16 weights + bf16 input stream + bf16 out,
    #            f32 accumulation) -------------------------------------------
    p_bf16 = cast_params(params, jnp.bfloat16)
    out3 = jax.block_until_ready(
        twentyclassification_forward(x_big.astype(jnp.bfloat16), p_bf16,
                                     out_dtype=jnp.bfloat16))
    assert out3.shape == (300, out_dim) and out3.dtype == jnp.bfloat16
    assert jnp.allclose(out3.astype(jnp.float32), ref2, atol=5e-2, rtol=5e-2)

    print("KERNEL_OK")
</pallas_src>

<mosaic_0001>
module attributes {stable_mosaic.version = 11 : i64} {
  func.func @_mlp_kernel(%arg0: i32, %arg1: memref<8x32xf32, #tpu.memory_space<vmem>>, %arg2: memref<32x64xf32, #tpu.memory_space<vmem>>, %arg3: memref<1x64xf32, #tpu.memory_space<vmem>>, %arg4: memref<64x64xf32, #tpu.memory_space<vmem>>, %arg5: memref<1x64xf32, #tpu.memory_space<vmem>>, %arg6: memref<64x64xf32, #tpu.memory_space<vmem>>, %arg7: memref<1x64xf32, #tpu.memory_space<vmem>>, %arg8: memref<64x20xf32, #tpu.memory_space<vmem>>, %arg9: memref<1x20xf32, #tpu.memory_space<vmem>>, %arg10: memref<8x20xf32, #tpu.memory_space<vmem>>) attributes {dimension_semantics = [#tpu.dimension_semantics<parallel>], iteration_bounds = array<i64: 1>, scalar_prefetch = 0 : i64, scratch_operands = 0 : i64, tpu.core_type = #tpu.core_type<tc>, window_params = [{transform_indices = @transform_0, window_bounds = array<i64: 8, 32>}, {pipeline_mode = #tpu.pipeline_mode<synchronous>, transform_indices = @transform_1, window_bounds = array<i64: 32, 64>}, {pipeline_mode = #tpu.pipeline_mode<synchronous>, transform_indices = @transform_2, window_bounds = array<i64: 1, 64>}, {pipeline_mode = #tpu.pipeline_mode<synchronous>, transform_indices = @transform_3, window_bounds = array<i64: 64, 64>}, {pipeline_mode = #tpu.pipeline_mode<synchronous>, transform_indices = @transform_4, window_bounds = array<i64: 1, 64>}, {pipeline_mode = #tpu.pipeline_mode<synchronous>, transform_indices = @transform_5, window_bounds = array<i64: 64, 64>}, {pipeline_mode = #tpu.pipeline_mode<synchronous>, transform_indices = @transform_6, window_bounds = array<i64: 1, 64>}, {pipeline_mode = #tpu.pipeline_mode<synchronous>, transform_indices = @transform_7, window_bounds = array<i64: 64, 20>}, {pipeline_mode = #tpu.pipeline_mode<synchronous>, transform_indices = @transform_8, window_bounds = array<i64: 1, 20>}, {transform_indices = @transform_9, window_bounds = array<i64: 8, 20>}]} {
    %c0 = arith.constant 0 : index
    %c0_0 = arith.constant 0 : index
    %0 = vector.load %arg1[%c0, %c0_0] : memref<8x32xf32, #tpu.memory_space<vmem>>, vector<8x32xf32>
    %c0_1 = arith.constant 0 : index
    %c0_2 = arith.constant 0 : index
    %1 = vector.load %arg2[%c0_1, %c0_2] : memref<32x64xf32, #tpu.memory_space<vmem>>, vector<32x64xf32>
    %cst = arith.constant dense<0.000000e+00> : vector<8x64xf32>
    %2 = tpu.matmul %0, %1, %cst {dimension_numbers = #tpu.dot_dimension_numbers<[1], [0], [0], [1], [0, 0, 1, 1], [], []>} : vector<8x32xf32>, vector<32x64xf32>, vector<8x64xf32> -> vector<8x64xf32>
    %c0_3 = arith.constant 0 : index
    %c0_4 = arith.constant 0 : index
    %3 = vector.load %arg3[%c0_3, %c0_4] : memref<1x64xf32, #tpu.memory_space<vmem>>, vector<1x64xf32>
    %4 = vector.broadcast %3 : vector<1x64xf32> to vector<8x64xf32>
    %5 = arith.addf %2, %4 : vector<8x64xf32>
    %cst_5 = arith.constant 0.000000e+00 : f32
    %6 = vector.broadcast %cst_5 : f32 to vector<8x64xf32>
    %7 = arith.maximumf %5, %6 : vector<8x64xf32>
    %c0_6 = arith.constant 0 : index
    %c0_7 = arith.constant 0 : index
    %8 = vector.load %arg4[%c0_6, %c0_7] : memref<64x64xf32, #tpu.memory_space<vmem>>, vector<64x64xf32>
    %cst_8 = arith.constant dense<0.000000e+00> : vector<8x64xf32>
    %9 = tpu.matmul %7, %8, %cst_8 {dimension_numbers = #tpu.dot_dimension_numbers<[1], [0], [0], [1], [0, 0, 1, 1], [], []>} : vector<8x64xf32>, vector<64x64xf32>, vector<8x64xf32> -> vector<8x64xf32>
    %c0_9 = arith.constant 0 : index
    %c0_10 = arith.constant 0 : index
    %10 = vector.load %arg5[%c0_9, %c0_10] : memref<1x64xf32, #tpu.memory_space<vmem>>, vector<1x64xf32>
    %11 = vector.broadcast %10 : vector<1x64xf32> to vector<8x64xf32>
    %12 = arith.addf %9, %11 : vector<8x64xf32>
    %cst_11 = arith.constant 0.000000e+00 : f32
    %13 = vector.broadcast %cst_11 : f32 to vector<8x64xf32>
    %14 = arith.maximumf %12, %13 : vector<8x64xf32>
    %c0_12 = arith.constant 0 : index
    %c0_13 = arith.constant 0 : index
    %15 = vector.load %arg6[%c0_12, %c0_13] : memref<64x64xf32, #tpu.memory_space<vmem>>, vector<64x64xf32>
    %cst_14 = arith.constant dense<0.000000e+00> : vector<8x64xf32>
    %16 = tpu.matmul %14, %15, %cst_14 {dimension_numbers = #tpu.dot_dimension_numbers<[1], [0], [0], [1], [0, 0, 1, 1], [], []>} : vector<8x64xf32>, vector<64x64xf32>, vector<8x64xf32> -> vector<8x64xf32>
    %c0_15 = arith.constant 0 : index
    %c0_16 = arith.constant 0 : index
    %17 = vector.load %arg7[%c0_15, %c0_16] : memref<1x64xf32, #tpu.memory_space<vmem>>, vector<1x64xf32>
    %18 = vector.broadcast %17 : vector<1x64xf32> to vector<8x64xf32>
    %19 = arith.addf %16, %18 : vector<8x64xf32>
    %cst_17 = arith.constant 0.000000e+00 : f32
    %20 = vector.broadcast %cst_17 : f32 to vector<8x64xf32>
    %21 = arith.maximumf %19, %20 : vector<8x64xf32>
    %c0_18 = arith.constant 0 : index
    %c0_19 = arith.constant 0 : index
    %22 = vector.load %arg8[%c0_18, %c0_19] : memref<64x20xf32, #tpu.memory_space<vmem>>, vector<64x20xf32>
    %cst_20 = arith.constant dense<0.000000e+00> : vector<8x20xf32>
    %23 = tpu.matmul %21, %22, %cst_20 {dimension_numbers = #tpu.dot_dimension_numbers<[1], [0], [0], [1], [0, 0, 1, 1], [], []>} : vector<8x64xf32>, vector<64x20xf32>, vector<8x20xf32> -> vector<8x20xf32>
    %c0_21 = arith.constant 0 : index
    %c0_22 = arith.constant 0 : index
    %24 = vector.load %arg9[%c0_21, %c0_22] : memref<1x20xf32, #tpu.memory_space<vmem>>, vector<1x20xf32>
    %25 = vector.broadcast %24 : vector<1x20xf32> to vector<8x20xf32>
    %26 = arith.addf %23, %25 : vector<8x20xf32>
    %c0_23 = arith.constant 0 : index
    %c0_24 = arith.constant 0 : index
    %27 = vector.load %arg10[%c0_23, %c0_24] : memref<8x20xf32, #tpu.memory_space<vmem>>, vector<8x20xf32>
    tpu.vector_store %arg10[%c0_23, %c0_24], %26 {strides = array<i32>} : memref<8x20xf32, #tpu.memory_space<vmem>>, vector<8x20xf32>,
    return
  }
  func.func @transform_0(%arg0: i32) -> (i32, i32) {
    %c0_i32 = arith.constant 0 : i32
    %c0_i32_0 = arith.constant 0 : i32
    return %arg0, %c0_i32 : i32, i32
  }
  func.func @transform_1(%arg0: i32) -> (i32, i32) {
    %c0_i32 = arith.constant 0 : i32
    %c0_i32_0 = arith.constant 0 : i32
    %c0_i32_1 = arith.constant 0 : i32
    return %c0_i32, %c0_i32_0 : i32, i32
  }
  func.func @transform_2(%arg0: i32) -> (i32, i32) {
    %c0_i32 = arith.constant 0 : i32
    %c0_i32_0 = arith.constant 0 : i32
    %c0_i32_1 = arith.constant 0 : i32
    return %c0_i32, %c0_i32_0 : i32, i32
  }
  func.func @transform_3(%arg0: i32) -> (i32, i32) {
    %c0_i32 = arith.constant 0 : i32
    %c0_i32_0 = arith.constant 0 : i32
    %c0_i32_1 = arith.constant 0 : i32
    return %c0_i32, %c0_i32_0 : i32, i32
  }
  func.func @transform_4(%arg0: i32) -> (i32, i32) {
    %c0_i32 = arith.constant 0 : i32
    %c0_i32_0 = arith.constant 0 : i32
    %c0_i32_1 = arith.constant 0 : i32
    return %c0_i32, %c0_i32_0 : i32, i32
  }
  func.func @transform_5(%arg0: i32) -> (i32, i32) {
    %c0_i32 = arith.constant 0 : i32
    %c0_i32_0 = arith.constant 0 : i32
    %c0_i32_1 = arith.constant 0 : i32
    return %c0_i32, %c0_i32_0 : i32, i32
  }
  func.func @transform_6(%arg0: i32) -> (i32, i32) {
    %c0_i32 = arith.constant 0 : i32
    %c0_i32_0 = arith.constant 0 : i32
    %c0_i32_1 = arith.constant 0 : i32
    return %c0_i32, %c0_i32_0 : i32, i32
  }
  func.func @transform_7(%arg0: i32) -> (i32, i32) {
    %c0_i32 = arith.constant 0 : i32
    %c0_i32_0 = arith.constant 0 : i32
    %c0_i32_1 = arith.constant 0 : i32
    return %c0_i32, %c0_i32_0 : i32, i32
  }
  func.func @transform_8(%arg0: i32) -> (i32, i32) {
    %c0_i32 = arith.constant 0 : i32
    %c0_i32_0 = arith.constant 0 : i32
    %c0_i32_1 = arith.constant 0 : i32
    return %c0_i32, %c0_i32_0 : i32, i32
  }
  func.func @transform_9(%arg0: i32) -> (i32, i32) {
    %c0_i32 = arith.constant 0 : i32
    %c0_i32_0 = arith.constant 0 : i32
    return %arg0, %c0_i32 : i32, i32
  }
}

</mosaic_0001>

<llo_original>
// kernel: tpu_custom_call.1
$region0: #{tpu_custom_call.1}
  #allocation0 [shape = 'u32[]', space=smem, size = 0x4, offset = 0x4, fixed_abs, tag = 'smem constant byte address 0x4 - core index']
  #allocation1 [shape = 'u32[72,128]{1,0:T(1,128)}', space=vmem, size = 0x9000, scoped, tag = 'internal scratch']
  %s0 = inlined_call_operand.vmem [shape: f32[8,32], index: 0, kind: input, shape index: {}]
  %s1 = inlined_call_operand.hbm [shape: f32[32,64], index: 1, kind: input, shape index: {}]
  %s2 = inlined_call_operand.vmem [shape: f32[1,64], index: 2, kind: input, shape index: {}]
  %s3 = inlined_call_operand.vmem [shape: f32[64,64], index: 3, kind: input, shape index: {}]
  %s4 = inlined_call_operand.vmem [shape: f32[1,64], index: 4, kind: input, shape index: {}]
  %s5 = inlined_call_operand.hbm [shape: f32[64,64], index: 5, kind: input, shape index: {}]
  %s6 = inlined_call_operand.vmem [shape: f32[1,64], index: 6, kind: input, shape index: {}]
  %s7 = inlined_call_operand.vmem [shape: f32[64,20], index: 7, kind: input, shape index: {}]
  %s8 = inlined_call_operand.vmem [shape: f32[1,20], index: 8, kind: input, shape index: {}]
  %s9 = inlined_call_operand.hbm [shape: f32[8,20], index: 9, kind: output, shape index: {}]
  %s10 = sld [smem:[#allocation0]]
  $region54: #{tpu_custom_call.1} parent=0
    _
  %s12 = ssub.s32 1, %s10
  %s13 = scalar_select 0, %s12, %s10
  $region1: #{tpu_custom_call.1} parent=0
    #allocation2 [shape = 'u8[16384]{0}', space=vmem, size = 0x4000, scoped, tag = 'input window, operand 1, single buffered']
    #allocation3 [shape = 's32[1]{0}', space=sflag, size = 0x4, scoped, tag = 'scoped memory for tpu_custom_call.1']
    #allocation4 [shape = 's32[1]{0}', space=sflag, size = 0x4, scoped, tag = 'scoped memory for tpu_custom_call.1']
    #allocation5 [shape = 'u8[32768]{0}', space=vmem, size = 0x8000, scoped, tag = 'input window, operand 5, single buffered']
    #allocation6 [shape = 's32[1]{0}', space=sflag, size = 0x4, scoped, tag = 'scoped memory for tpu_custom_call.1']
    #allocation7 [shape = 'u8[4096]{0}', space=vmem, size = 0x1000, scoped, tag = 'output window, operand 0, single buffered']
    %14 = vsyncpa [#allocation3], 0
    %15 = vsyncpa [#allocation6], 0
    %16 = vsyncpa [#allocation4], 0
    // Predicated region
    $region2: #{tpu_custom_call.1} parent=1 // pred_check
      _
    $region3: #{tpu_custom_call.1} parent=1 // pred_check_branch
      %18 = sbr.rel (0) target = $region5
    $region4: #{tpu_custom_call.1} parent=1 // pred_region
      _
    $region5: #{tpu_custom_call.1} parent=1 // pred_fallthru
      _
    // Predicated region
    $region6: #{tpu_custom_call.1} parent=1 // pred_check
      _
    $region7: #{tpu_custom_call.1} parent=1 // pred_check_branch
      %20 = sbr.rel (0) target = $region9
    $region8: #{tpu_custom_call.1} parent=1 // pred_region
      %22 = vsyncadd [#allocation3], 0
      %s23 = sshll.u32 %s1, 4
      %s24 = int_to_ptr.hbm [resolvable:$true] %s23
      %s25 = sshll.u32 [#allocation2], 4
      %s26 = int_to_ptr.vmem [resolvable:$true] %s25
      %31 = dma.hbm_to_vmem [thread:$0]  %s24, 512, %s26, [#allocation3], 128, 128, 8
    $region9: #{tpu_custom_call.1} parent=1 // pred_fallthru
      _
    // Predicated region
    $region10: #{tpu_custom_call.1} parent=1 // pred_check
      _
    $region11: #{tpu_custom_call.1} parent=1 // pred_check_branch
      %33 = sbr.rel (0) target = $region13
    $region12: #{tpu_custom_call.1} parent=1 // pred_region
      _
    $region13: #{tpu_custom_call.1} parent=1 // pred_fallthru
      _
    // Predicated region
    $region14: #{tpu_custom_call.1} parent=1 // pred_check
      _
    $region15: #{tpu_custom_call.1} parent=1 // pred_check_branch
      %35 = sbr.rel (0) target = $region17
    $region16: #{tpu_custom_call.1} parent=1 // pred_region
      _
    $region17: #{tpu_custom_call.1} parent=1 // pred_fallthru
      _
    // Predicated region
    $region18: #{tpu_custom_call.1} parent=1 // pred_check
      _
    $region19: #{tpu_custom_call.1} parent=1 // pred_check_branch
      %37 = sbr.rel (0) target = $region21
    $region20: #{tpu_custom_call.1} parent=1 // pred_region
      _
    $region21: #{tpu_custom_call.1} parent=1 // pred_fallthru
      _
    // Predicated region
    $region22: #{tpu_custom_call.1} parent=1 // pred_check
      _
    $region23: #{tpu_custom_call.1} parent=1 // pred_check_branch
      %39 = sbr.rel (0) target = $region25
    $region24: #{tpu_custom_call.1} parent=1 // pred_region
      %41 = vsyncadd [#allocation6], 0
      %s42 = sshll.u32 %s5, 4
      %s43 = int_to_ptr.hbm [resolvable:$true] %s42
      %s44 = sshll.u32 [#allocation5], 4
      %s45 = int_to_ptr.vmem [resolvable:$true] %s44
      %50 = dma.hbm_to_vmem [thread:$0]  %s43, 1024, %s45, [#allocation6], 128, 128, 8
    $region25: #{tpu_custom_call.1} parent=1 // pred_fallthru
      _
    // Predicated region
    $region26: #{tpu_custom_call.1} parent=1 // pred_check
      _
    $region27: #{tpu_custom_call.1} parent=1 // pred_check_branch
      %52 = sbr.rel (0) target = $region29
    $region28: #{tpu_custom_call.1} parent=1 // pred_region
      _
    $region29: #{tpu_custom_call.1} parent=1 // pred_fallthru
      _
    // Predicated region
    $region30: #{tpu_custom_call.1} parent=1 // pred_check
      _
    $region31: #{tpu_custom_call.1} parent=1 // pred_check_branch
      %54 = sbr.rel (0) target = $region33
    $region32: #{tpu_custom_call.1} parent=1 // pred_region
      _
    $region33: #{tpu_custom_call.1} parent=1 // pred_fallthru
      _
    // Predicated region
    $region34: #{tpu_custom_call.1} parent=1 // pred_check
      _
    $region35: #{tpu_custom_call.1} parent=1 // pred_check_branch
      %56 = sbr.rel (0) target = $region37
    $region36: #{tpu_custom_call.1} parent=1 // pred_region
      _
    $region37: #{tpu_custom_call.1} parent=1 // pred_fallthru
      _
    // Predicated region
    $region38: #{tpu_custom_call.1} parent=1 // pred_check
      _
    $region39: #{tpu_custom_call.1} parent=1 // pred_check_branch
      %58 = sbr.rel (0) target = $region41
    $region40: #{tpu_custom_call.1} parent=1 // pred_region
      %60 = dma.done [#allocation3], 512
    $region41: #{tpu_custom_call.1} parent=1 // pred_fallthru
      _
    // Predicated region
    $region42: #{tpu_custom_call.1} parent=1 // pred_check
      _
    $region43: #{tpu_custom_call.1} parent=1 // pred_check_branch
      %62 = sbr.rel (0) target = $region45
    $region44: #{tpu_custom_call.1} parent=1 // pred_region
      %64 = dma.done [#allocation6], 1024
    $region45: #{tpu_custom_call.1} parent=1 // pred_fallthru
      _
    %v65 = vld [vmem:[%s0] sm:$0xff]
    %v66 = vld [vmem:[#allocation2] sm:$0xff]
    %v67 = vld [vmem:[#allocation2 + $0x8] sm:$0xff]
    %v68 = vld [vmem:[#allocation2 + $0x10] sm:$0xff]
    %v69 = vld [vmem:[#allocation2 + $0x18] sm:$0xff]
    %v70 = vld [vmem:[%s2] sm:$0x1]
    %v72 = vperm.slane %v70, 0
    %vm74 = vcmask 261120
    %v76 = vsel %vm74, %v65, 0
    %78 = vmatpush.msra.mxu0 0.0
    %79 = vmatpush.msra.mxu0 0.0
    %80 = vmatpush.msra.mxu0 0.0
    %81 = vmatpush.msra.mxu0 0.0
    %82 = vmatpush.msra.mxu0 0.0
    %83 = vmatpush.msra.mxu0 0.0
    %84 = vmatpush.msra.mxu0 0.0
    %85 = vmatpush.msra.mxu0 0.0
    %86 = vmatpush.msra.mxu0 0.0
    %87 = vmatpush.msra.mxu0 0.0
    %88 = vmatpush.msra.mxu0 0.0
    %89 = vmatpush.msra.mxu0 0.0
    %90 = vmatpush.msra.mxu0 %v69
    %91 = vmatpush.msra.mxu0 %v68
    %92 = vmatpush.msra.mxu0 %v67
    %93 = vmatpush.msra.mxu0 %v66
    %94 = vmatmul.f32.gmra.mxu0 %v76
    %v95 = vpop.f32.mrf.mxu0
    %v96 = vadd.f32 %v72, %v95
    %97 = vdwg.mxu0
    %v98 = vmax.f32 %v96, 0.0
    %v99 = vld [vmem:[%s3] sm:$0xff]
    %v100 = vld [vmem:[%s3 + $0x8] sm:$0xff]
    %v101 = vld [vmem:[%s3 + $0x10] sm:$0xff]
    %v102 = vld [vmem:[%s3 + $0x18] sm:$0xff]
    %v103 = vld [vmem:[%s3 + $0x20] sm:$0xff]
    %v104 = vld [vmem:[%s3 + $0x28] sm:$0xff]
    %v105 = vld [vmem:[%s3 + $0x30] sm:$0xff]
    %v106 = vld [vmem:[%s3 + $0x38] sm:$0xff]
    %v107 = vld [vmem:[%s4] sm:$0x1]
    %v109 = vperm.slane %v107, 0
    %vm111 = vcmask 523264
    %v113 = vsel %vm111, %v98, 0
    %115 = vmatpush.msra.mxu0 0.0
    %116 = vmatpush.msra.mxu0 0.0
    %117 = vmatpush.msra.mxu0 0.0
    %118 = vmatpush.msra.mxu0 0.0
    %119 = vmatpush.msra.mxu0 0.0
    %120 = vmatpush.msra.mxu0 0.0
    %121 = vmatpush.msra.mxu0 0.0
    %122 = vmatpush.msra.mxu0 0.0
    %123 = vmatpush.msra.mxu0 %v106
    %124 = vmatpush.msra.mxu0 %v105
    %125 = vmatpush.msra.mxu0 %v104
    %126 = vmatpush.msra.mxu0 %v103
    %127 = vmatpush.msra.mxu0 %v102
    %128 = vmatpush.msra.mxu0 %v101
    %129 = vmatpush.msra.mxu0 %v100
    %130 = vmatpush.msra.mxu0 %v99
    %131 = vmatmul.f32.gmra.mxu0 %v113
    %v132 = vpop.f32.mrf.mxu0
    %v133 = vadd.f32 %v109, %v132
    %134 = vdwg.mxu0
    %v135 = vmax.f32 %v133, 0.0
    %v136 = vld [vmem:[#allocation5] sm:$0xff]
    %v137 = vld [vmem:[#allocation5 + $0x8] sm:$0xff]
    %v138 = vld [vmem:[#allocation5 + $0x10] sm:$0xff]
    %v139 = vld [vmem:[#allocation5 + $0x18] sm:$0xff]
    %v140 = vld [vmem:[#allocation5 + $0x20] sm:$0xff]
    %v141 = vld [vmem:[#allocation5 + $0x28] sm:$0xff]
    %v142 = vld [vmem:[#allocation5 + $0x30] sm:$0xff]
    %v143 = vld [vmem:[#allocation5 + $0x38] sm:$0xff]
    %v144 = vld [vmem:[%s6] sm:$0x1]
    %v146 = vperm.slane %v144, 0
    %v149 = vsel %vm111, %v135, 0
    %151 = vmatpush.msra.mxu0 0.0
    %152 = vmatpush.msra.mxu0 0.0
    %153 = vmatpush.msra.mxu0 0.0
    %154 = vmatpush.msra.mxu0 0.0
    %155 = vmatpush.msra.mxu0 0.0
    %156 = vmatpush.msra.mxu0 0.0
    %157 = vmatpush.msra.mxu0 0.0
    %158 = vmatpush.msra.mxu0 0.0
    %159 = vmatpush.msra.mxu0 %v143
    %160 = vmatpush.msra.mxu0 %v142
    %161 = vmatpush.msra.mxu0 %v141
    %162 = vmatpush.msra.mxu0 %v140
    %163 = vmatpush.msra.mxu0 %v139
    %164 = vmatpush.msra.mxu0 %v138
    %165 = vmatpush.msra.mxu0 %v137
    %166 = vmatpush.msra.mxu0 %v136
    %167 = vmatmul.f32.gmra.mxu0 %v149
    %v168 = vpop.f32.mrf.mxu0
    %v169 = vadd.f32 %v146, %v168
    %170 = vdwg.mxu0
    %v171 = vmax.f32 %v169, 0.0
    %v172 = vld [vmem:[%s7] sm:$0xff]
    %v173 = vld [vmem:[%s7 + $0x8] sm:$0xff]
    %v174 = vld [vmem:[%s7 + $0x10] sm:$0xff]
    %v175 = vld [vmem:[%s7 + $0x18] sm:$0xff]
    %v176 = vld [vmem:[%s7 + $0x20] sm:$0xff]
    %v177 = vld [vmem:[%s7 + $0x28] sm:$0xff]
    %v178 = vld [vmem:[%s7 + $0x30] sm:$0xff]
    %v179 = vld [vmem:[%s7 + $0x38] sm:$0xff]
    %v180 = vld [vmem:[%s8] sm:$0x1]
    %v182 = vperm.slane %v180, 0
    %v185 = vsel %vm111, %v171, 0
    %187 = vmatpush.msra.mxu0 0.0
    %188 = vmatpush.msra.mxu0 0.0
    %189 = vmatpush.msra.mxu0 0.0
    %190 = vmatpush.msra.mxu0 0.0
    %191 = vmatpush.msra.mxu0 0.0
    %192 = vmatpush.msra.mxu0 0.0
    %193 = vmatpush.msra.mxu0 0.0
    %194 = vmatpush.msra.mxu0 0.0
    %195 = vmatpush.msra.mxu0 %v179
    %196 = vmatpush.msra.mxu0 %v178
    %197 = vmatpush.msra.mxu0 %v177
    %198 = vmatpush.msra.mxu0 %v176
    %199 = vmatpush.msra.mxu0 %v175
    %200 = vmatpush.msra.mxu0 %v174
    %201 = vmatpush.msra.mxu0 %v173
    %202 = vmatpush.msra.mxu0 %v172
    %203 = vmatmul.f32.gmra.mxu0 %v185
    %v204 = vpop.f32.mrf.mxu0
    %v205 = vadd.f32 %v182, %v204
    %206 = vdwg.mxu0
    %vm207 = vcmask 162816
    %208 = vst.msk [vmem:[#allocation7] sm:$0xff] %vm207, %v205
    // Predicated region
    $region46: #{tpu_custom_call.1} parent=1 // pred_check
      _
    $region47: #{tpu_custom_call.1} parent=1 // pred_check_branch
      %210 = sbr.rel (0) target = $region49
    $region48: #{tpu_custom_call.1} parent=1 // pred_region
      %212 = vsyncadd [#allocation4], 0
      %s214 = sshll.u32 [#allocation7], 4
      %s215 = int_to_ptr.vmem [resolvable:$true] %s214
      %s216 = sshll.u32 %s9, 4
      %s217 = int_to_ptr.hbm [resolvable:$true] %s216
      %219 = dma.vmem_to_hbm [thread:$0]  %s215, 128, %s217, [#allocation4]
    $region49: #{tpu_custom_call.1} parent=1 // pred_fallthru
      _
    // Predicated region
    $region50: #{tpu_custom_call.1} parent=1 // pred_check
      _
    $region51: #{tpu_custom_call.1} parent=1 // pred_check_branch
      %221 = sbr.rel (0) target = $region53
    $region52: #{tpu_custom_call.1} parent=1 // pred_region
      %223 = dma.done [#allocation4], 128
    $region53: #{tpu_custom_call.1} parent=1 // pred_fallthru
      _
    %224 = vsyncpa [#allocation3], 1
    %225 = vsyncpa [#allocation6], 1
    %226 = vsyncpa [#allocation4], 1

</llo_original>
